<compile_context>
chip_gen: v5e
topology: v5e:2x2
jax: 0.10.0
libtpu: 0.0.40
codegen_flags: <defaults>
</compile_context>

<pallas_src>
import jax
import jax.numpy as jnp
from jax.experimental import pallas as pl
from jax.experimental.pallas import tpu as pltpu


def _distributionlize_kernel(emb_t_ref, act_ref, out_ref):
    # emb_t_ref: (D, N)  stacked symbol embeddings, transposed (VMEM)
    # act_ref:   (D, 1)  action vector as a column (VMEM)
    # out_ref:   (2, N)  row 0 = likenesses, row 1 = rawness (VMEM)
    emb_t = emb_t_ref[...]                       # (D, N)
    act = act_ref[...]                           # (D, 1)

    # VPU: broadcast the action column across lanes and multiply elementwise;
    # XLU: reduce across sublanes (D) -> rawness directly in (1, N) layout.
    prod = emb_t * act                           # (D, N)
    rawness = jnp.sum(prod, axis=0, keepdims=True)   # (1, N), f32

    # Numerically stable softmax along the action axis (all f32).
    m = jnp.max(rawness, axis=1, keepdims=True)
    e = jnp.exp(rawness - m)
    denom = jnp.sum(e, axis=1, keepdims=True)
    likenesses = e * pl.reciprocal(denom, approx=False)

    out_ref[0:1, :] = likenesses.astype(out_ref.dtype)
    out_ref[1:2, :] = rawness.astype(out_ref.dtype)


@jax.jit
def distributionlize(emb_matrix, action_vector):
    """emb_matrix: (N, D) float32, action_vector: (1, D) float32.

    Returns (likenesses, rawness), each (1, N) float32.
    """
    n, d = emb_matrix.shape
    assert action_vector.shape == (1, d)

    # Layout plumbing in the wrapper (cheap XLA ops on tiny arrays): present the
    # embeddings transposed and the action vector as a column so the kernel's
    # lane axis is the action axis and no in-kernel transpose is needed.
    emb_t = jnp.transpose(emb_matrix)            # (D, N)
    act_col = jnp.reshape(action_vector, (d, 1)) # (D, 1)

    fused = pl.pallas_call(
        _distributionlize_kernel,
        out_shape=jax.ShapeDtypeStruct((2, n), jnp.float32),
        in_specs=[
            pl.BlockSpec(memory_space=pltpu.MemorySpace.VMEM),
            pl.BlockSpec(memory_space=pltpu.MemorySpace.VMEM),
        ],
        out_specs=pl.BlockSpec(memory_space=pltpu.MemorySpace.VMEM),
    )(emb_t, act_col)

    likenesses = fused[0:1, :]
    rawness = fused[1:2, :]
    return likenesses, rawness


def reference(emb_matrix, action_vector):
    raw = action_vector @ emb_matrix.T
    like = jax.nn.softmax(raw, axis=1)
    return like, raw


if __name__ == "__main__":
    # Deterministic synthetic SymbolEmbeddings: dict str(action) -> (1, D) param.
    D = 32                                       # embedding width
    available_acts = [0, 1, 2, 3, 4, 5, 6, 7]    # N = 8 available actions

    key = jax.random.PRNGKey(0)
    keys = jax.random.split(key, len(available_acts) + 1)
    SymbolEmbeddings = {
        str(a): jax.random.normal(keys[i], (1, D), dtype=jnp.float32)
        for i, a in enumerate(available_acts)
    }
    action_vector = jax.random.normal(keys[-1], (1, D), dtype=jnp.float32)

    # Glue (plain JAX): stack the per-action embedding rows, same order as the
    # torch.cat over available_acts in the original module.
    emb_matrix = jnp.concatenate(
        [SymbolEmbeddings[str(a)] for a in available_acts], axis=0)  # (N, D)

    likenesses, rawness = distributionlize(emb_matrix, action_vector)
    jax.block_until_ready((likenesses, rawness))

    like_ref, raw_ref = reference(emb_matrix, action_vector)
    assert likenesses.shape == (1, len(available_acts))
    assert rawness.shape == (1, len(available_acts))
    assert jnp.allclose(rawness, raw_ref, atol=1e-5, rtol=1e-5)
    assert jnp.allclose(likenesses, like_ref, atol=1e-5, rtol=1e-5)

    print("KERNEL_OK")
</pallas_src>

<mosaic_0001>
module attributes {stable_mosaic.version = 11 : i64} {
  func.func @_distributionlize_kernel(%arg0: memref<32x8xf32, #tpu.memory_space<vmem>>, %arg1: memref<32x1xf32, #tpu.memory_space<vmem>>, %arg2: memref<2x8xf32, #tpu.memory_space<vmem>>) attributes {dimension_semantics = [], scalar_prefetch = 0 : i64, scratch_operands = 0 : i64, tpu.core_type = #tpu.core_type<tc>} {
    %c0 = arith.constant 0 : index
    %c0_0 = arith.constant 0 : index
    %0 = vector.load %arg0[%c0, %c0_0] : memref<32x8xf32, #tpu.memory_space<vmem>>, vector<32x8xf32>
    %c0_1 = arith.constant 0 : index
    %c0_2 = arith.constant 0 : index
    %1 = vector.load %arg1[%c0_1, %c0_2] : memref<32x1xf32, #tpu.memory_space<vmem>>, vector<32x1xf32>
    %2 = vector.broadcast %1 : vector<32x1xf32> to vector<32x8xf32>
    %3 = arith.mulf %0, %2 : vector<32x8xf32>
    %cst = arith.constant dense<0.000000e+00> : vector<8xf32>
    %4 = vector.multi_reduction <add>, %3, %cst [0] : vector<32x8xf32> to vector<8xf32>
    %5 = vector.shape_cast %4 : vector<8xf32> to vector<1x8xf32>
    %cst_3 = arith.constant dense<0xFF800000> : vector<1xf32>
    %6 = vector.multi_reduction <maximumf>, %5, %cst_3 [1] : vector<1x8xf32> to vector<1xf32>
    %7 = vector.shape_cast %6 : vector<1xf32> to vector<1x1xf32>
    %8 = vector.broadcast %7 : vector<1x1xf32> to vector<1x8xf32>
    %9 = arith.subf %5, %8 : vector<1x8xf32>
    %10 = math.exp %9 : vector<1x8xf32>
    %cst_4 = arith.constant dense<0.000000e+00> : vector<1xf32>
    %11 = vector.multi_reduction <add>, %10, %cst_4 [1] : vector<1x8xf32> to vector<1xf32>
    %12 = vector.shape_cast %11 : vector<1xf32> to vector<1x1xf32>
    %13 = tpu.reciprocal %12 : vector<1x1xf32> -> vector<1x1xf32>
    %14 = vector.broadcast %13 : vector<1x1xf32> to vector<1x8xf32>
    %15 = arith.mulf %10, %14 : vector<1x8xf32>
    %c0_5 = arith.constant 0 : index
    %c0_6 = arith.constant 0 : index
    %16 = vector.load %arg2[%c0_5, %c0_6] : memref<2x8xf32, #tpu.memory_space<vmem>>, vector<1x8xf32>
    tpu.vector_store %arg2[%c0_5, %c0_6], %15 {strides = array<i32>} : memref<2x8xf32, #tpu.memory_space<vmem>>, vector<1x8xf32>,
    %c1 = arith.constant 1 : index
    %c0_7 = arith.constant 0 : index
    %17 = vector.load %arg2[%c1, %c0_7] : memref<2x8xf32, #tpu.memory_space<vmem>>, vector<1x8xf32>
    tpu.vector_store %arg2[%c1, %c0_7], %5 {strides = array<i32>} : memref<2x8xf32, #tpu.memory_space<vmem>>, vector<1x8xf32>,
    return
  }
}

</mosaic_0001>

<llo_original>
// kernel: distributionlize.1
$region0: #{distributionlize.1}
  #allocation0 [shape = 'u32[]', space=smem, size = 0x4, offset = 0x4, fixed_abs, tag = 'smem constant byte address 0x4 - core index']
  #allocation1 [shape = 'u32[72,128]{1,0:T(1,128)}', space=vmem, size = 0x9000, scoped, tag = 'internal scratch']
  %s0 = inlined_call_operand.vmem [shape: f32[32,8], index: 0, kind: input, shape index: {}]
  %s1 = inlined_call_operand.vmem [shape: f32[32,1], index: 1, kind: input, shape index: {}]
  %s2 = inlined_call_operand.vmem [shape: f32[2,8], index: 2, kind: output, shape index: {}]
  %s3 = sld [smem:[#allocation0]]
  $region18: #{distributionlize.1} parent=0
    _
  %s5 = ssub.s32 1, %s3
  %s6 = scalar_select 0, %s5, %s3
  // Predicated region
  $region2: #{distributionlize.1} parent=0 // pred_check
    _
  $region3: #{distributionlize.1} parent=0 // pred_check_branch
    %8 = sbr.rel (0) target = $region5
  $region4: #{distributionlize.1} parent=0 // pred_region
    _
  $region5: #{distributionlize.1} parent=0 // pred_fallthru
    _
  // Predicated region
  $region6: #{distributionlize.1} parent=0 // pred_check
    _
  $region7: #{distributionlize.1} parent=0 // pred_check_branch
    %10 = sbr.rel (0) target = $region9
  $region8: #{distributionlize.1} parent=0 // pred_region
    _
  $region9: #{distributionlize.1} parent=0 // pred_fallthru
    _
  %v11 = vld [vmem:[%s0] sm:$0xff]
  %v12 = vld [vmem:[%s0 + $0x8] sm:$0xff]
  %v13 = vld [vmem:[%s0 + $0x10] sm:$0xff]
  %v14 = vld [vmem:[%s0 + $0x18] sm:$0xff]
  %v15 = vld [vmem:[%s1] sm:$0xff]
  %v16 = vld [vmem:[%s1 + $0x8] sm:$0xff]
  %v17 = vld [vmem:[%s1 + $0x10] sm:$0xff]
  %v18 = vld [vmem:[%s1 + $0x18] sm:$0xff]
  %20 = vset.pattern.permute.xlu0 0
  %21 = vperm.xlu0 %20, %v15
  %v22 = vpop.permute.xlu0 %21
  %25 = vset.pattern.permute.xlu0 0
  %26 = vperm.xlu0 %25, %v16
  %v27 = vpop.permute.xlu0 %26
  %30 = vset.pattern.permute.xlu0 0
  %31 = vperm.xlu0 %30, %v17
  %v32 = vpop.permute.xlu0 %31
  %35 = vset.pattern.permute.xlu0 0
  %36 = vperm.xlu0 %35, %v18
  %v37 = vpop.permute.xlu0 %36
  %v39 = vmul.f32 %v11, %v22
  %v40 = vmul.f32 %v12, %v27
  %v41 = vmul.f32 %v13, %v32
  %v42 = vmul.f32 %v14, %v37
  %vm43 = vcmask 64512
  %v44 = vsel %vm43, %v39, 0.0
  %v45 = vsel %vm43, %v40, 0.0
  %v46 = vadd.f32 %v44, %v45
  %v47 = vsel %vm43, %v41, 0.0
  %v48 = vadd.f32 %v46, %v47
  %v49 = vsel %vm43, %v42, 0.0
  %v50 = vadd.f32 %v48, %v49
  %v51 = vrot.slane %v50, 4
  %v52 = vadd.f32 %v50, %v51
  %v53 = vrot.slane %v52, 2
  %v54 = vadd.f32 %v52, %v53
  %v55 = vrot.slane %v54, 1
  %v56 = vadd.f32 %v54, %v55
  %v57 = vsel %vm43, %v56, -inf
  %58 = vmax.xlane.f32.xlu0 %v57
  %v59 = vpop.xlane.xlu0 %58
  %v60 = vsub.f32 %v56, %v59
  %v61 = vmul.f32 %v60, 1.442695
  %v62 = vpow.pop %v61
  %v63 = vsel %vm43, %v62, 0.0
  %64 = vadd.xlane.f32.xlu0 %v63
  %v65 = vpop.xlane.xlu0 %64
  %v66 = vrcp.pop %v65
  %v67 = vmul.f32 %v65, %v66
  %v68 = vsub.f32 1.0, %v67
  %v69 = vmul.f32 %v66, %v68
  %v70 = vadd.f32 %v66, %v69
  %vm71 = vweird.f32 %v65
  %vm72 = vweird.f32 %v66
  %vm73 = vmor %vm71, %vm72
  %v74 = vsel %vm73, %v66, %v70
  %v75 = vand.u32 2147483647, %v65
  %vm76 = vcmp.eq.f32.partialorder %v75, 8.507059e+37
  %v77 = vand.u32 %v65, 2147483648
  %v78 = vor.u32 1.1754944e-38, %v77
  %v79 = vsel %vm76, %v78, %v74
  %v80 = vmul.f32 %v62, %v79
  %vm81 = vcmask 57344
  %82 = vst.msk [vmem:[%s2] sm:$0x1] %vm81, %v80
  %83 = vst.msk [vmem:[%s2 + $0x1] sm:$0x1] %vm81, %v56
  // Predicated region
  $region10: #{distributionlize.1} parent=0 // pred_check
    _
  $region11: #{distributionlize.1} parent=0 // pred_check_branch
    %85 = sbr.rel (0) target = $region13
  $region12: #{distributionlize.1} parent=0 // pred_region
    _
  $region13: #{distributionlize.1} parent=0 // pred_fallthru
    _
  // Predicated region
  $region14: #{distributionlize.1} parent=0 // pred_check
    _
  $region15: #{distributionlize.1} parent=0 // pred_check_branch
    %87 = sbr.rel (0) target = $region17
  $region16: #{distributionlize.1} parent=0 // pred_region
    _
  $region17: #{distributionlize.1} parent=0 // pred_fallthru
    _

</llo_original>
